<compile_context>
chip_gen: v7x
topology: tpu7x:2x2x1
jax: 0.10.0
libtpu: 0.0.40
codegen_flags: <defaults>
</compile_context>

<pallas_src>
import functools

import jax
import jax.numpy as jnp
from jax.experimental import pallas as pl
from jax.experimental.pallas import tpu as pltpu

LANES = 128
TARGET_TILE_ROWS = 8192  # 4 MiB f32 per input block; sweep 2048/4096/8192


def _mrae_kernel(out_ref, gt_ref, psum_ref, *, eps, rows, tile_rows,
                 tiles_per_half):
    """Accumulate sum(|gt - out| / (gt + eps)) for one (tile_rows, 128) tile.

    psum_ref is a (1, 8, 128) partial-sum block, resident in VMEM across the
    inner ("arbitrary") grid axis; it acts as the accumulator for this half.
    """
    p = pl.program_id(0)  # which half (parallel axis; 2 TCs on v7x)
    i = pl.program_id(1)  # row-block within the half (reduction axis)

    @pl.when(i == 0)
    def _init():
        psum_ref[...] = jnp.zeros_like(psum_ref)

    # First global row of this tile, from the *unclamped* block index. The
    # overhang block of the second half (clamped by the index_map to re-read
    # the last valid block) gets row0 >= rows and is fully masked out.
    row0 = (p * tiles_per_half + i) * tile_rows
    is_full = row0 + tile_rows <= rows

    def _rel(gt, pred):
        den = gt + eps
        # EUP approximate reciprocal + one Newton step (2 VALU ops,
        # ~1e-8 relative error) keeps the heavy part off the VALU slot.
        r = pl.reciprocal(den, approx=True)
        r = r * (2.0 - den * r)
        return jnp.abs(gt - pred) * r

    @pl.when(is_full)
    def _fast():
        gt = gt_ref[...].astype(jnp.float32)
        pred = out_ref[...].astype(jnp.float32)
        rel = _rel(gt, pred)
        # VPU-only accumulation into a vreg-shaped partial sum; the
        # cross-lane/sublane reduce is deferred to the wrapper.
        psum_ref[0, :, :] += rel.reshape(tile_rows // 8, 8, LANES).sum(axis=0)

    @pl.when(jnp.logical_not(is_full))
    def _masked():
        gt = gt_ref[...].astype(jnp.float32)
        pred = out_ref[...].astype(jnp.float32)
        row_idx = jax.lax.broadcasted_iota(jnp.int32, (tile_rows, LANES), 0)
        valid = (row0 + row_idx) < rows
        rel = jnp.where(valid, _rel(gt, pred), 0.0)
        psum_ref[0, :, :] += rel.reshape(tile_rows // 8, 8, LANES).sum(axis=0)


def mrae_loss(out, gt, eps=0.001):
    """Mean Relative Absolute Error, computed in a Pallas TPU kernel."""
    assert out.shape == gt.shape, "out/gt must have the same shape"
    n_elems = out.size
    assert n_elems > 0

    out_flat = jnp.ravel(out)
    gt_flat = jnp.ravel(gt)

    # Lane-aligned prefix goes through the kernel; the <128-element tail (if
    # any) is summed in plain JAX — no full-array pad/copy pass through HBM.
    n_main = (n_elems // LANES) * LANES
    rem = n_elems - n_main
    if rem:
        gt_t = gt_flat[n_main:].astype(jnp.float32)
        out_t = out_flat[n_main:].astype(jnp.float32)
        tail_sum = jnp.sum(jnp.abs(gt_t - out_t) / (gt_t + eps))
        out_main = out_flat[:n_main]
        gt_main = gt_flat[:n_main]
    else:
        tail_sum = jnp.float32(0.0)
        out_main = out_flat
        gt_main = gt_flat

    if n_main == 0:
        # Tiny input (< 128 elements): nothing for the kernel to do.
        return tail_sum / n_elems

    rows = n_main // LANES
    out2d = out_main.reshape(rows, LANES)
    gt2d = gt_main.reshape(rows, LANES)

    # Tile height: as large as TARGET_TILE_ROWS, shrunk for small inputs so
    # both halves of the parallel split have work. Rounded to the native
    # sublane packing of the input dtype (8 rows f32, 16 bf16, 32 int8/fp8).
    itemsize = jnp.dtype(out.dtype).itemsize
    row_align = max(8, 32 // max(1, itemsize))
    target = max(row_align, (TARGET_TILE_ROWS // row_align) * row_align)
    half_rows = pl.cdiv(rows, 2)
    tile_rows = min(target,
                    ((half_rows + row_align - 1) // row_align) * row_align)
    tile_rows = max(row_align, tile_rows)
    n_tiles = pl.cdiv(rows, tile_rows)
    tiles_per_half = pl.cdiv(n_tiles, 2)

    kernel = functools.partial(
        _mrae_kernel,
        eps=float(eps),
        rows=rows,
        tile_rows=tile_rows,
        tiles_per_half=tiles_per_half,
    )

    # Clamp the block index so the (at most one) over-hanging block of the
    # second half re-reads the last valid block instead of going out of
    # bounds; its contribution is zeroed by the in-kernel row mask.
    def in_map(p, i):
        return (jnp.minimum(p * tiles_per_half + i, n_tiles - 1), 0)

    # TODO(synk): verify on v7x (xprof) that the size-2 "parallel" axis really
    # shards across both TensorCores; if not, switch to pltpu.CORE_PARALLEL.
    partials = pl.pallas_call(
        kernel,
        out_shape=jax.ShapeDtypeStruct((2, 8, LANES), jnp.float32),
        grid=(2, tiles_per_half),
        in_specs=[
            pl.BlockSpec((tile_rows, LANES), in_map),
            pl.BlockSpec((tile_rows, LANES), in_map),
        ],
        out_specs=pl.BlockSpec((1, 8, LANES), lambda p, i: (p, 0, 0)),
        compiler_params=pltpu.CompilerParams(
            dimension_semantics=("parallel", "arbitrary"),
            vmem_limit_bytes=40 * 1024 * 1024,
        ),
        cost_estimate=pl.CostEstimate(
            flops=6 * n_main,
            transcendentals=n_main,
            bytes_accessed=2 * n_main * itemsize + 2 * 8 * LANES * 4,
        ),
    )(out2d, gt2d)

    # Single cross-lane/sublane reduce + mean, on a tiny (2, 8, 128) array.
    return (jnp.sum(partials) + tail_sum) / n_elems


if __name__ == "__main__":
    key = jax.random.PRNGKey(0)
    k_out, k_gt = jax.random.split(key)

    # Small NCHW image-like input, consistent with the module's usage.
    shape = (2, 4, 16, 16)
    out = jax.random.normal(k_out, shape, dtype=jnp.float32)
    # gt strictly positive (typical hyperspectral intensities) so the example
    # does not blow up on the division, matching realistic usage.
    gt = jax.random.uniform(k_gt, shape, dtype=jnp.float32, minval=0.1,
                            maxval=1.0)

    loss = mrae_loss(out, gt, eps=0.001)
    loss = jax.block_until_ready(loss)

    # Cross-check against plain JAX reference.
    ref = jnp.mean(jnp.abs(gt - out) / (gt + 0.001))
    assert jnp.allclose(loss, ref, rtol=1e-5, atol=1e-6), (loss, ref)

    print("KERNEL_OK")
</pallas_src>

<mosaic_0001>
module attributes {stable_mosaic.version = 11 : i64} {
  func.func @_mrae_kernel(%arg0: i32, %arg1: i32, %arg2: memref<8x128xf32, #tpu.memory_space<vmem>>, %arg3: memref<8x128xf32, #tpu.memory_space<vmem>>, %arg4: memref<1x8x128xf32, #tpu.memory_space<vmem>>) attributes {dimension_semantics = [#tpu.dimension_semantics<parallel>, #tpu.dimension_semantics<arbitrary>], iteration_bounds = array<i64: 2, 1>, scalar_prefetch = 0 : i64, scratch_operands = 0 : i64, tpu.core_type = #tpu.core_type<tc>, window_params = [{transform_indices = @transform_0, window_bounds = array<i64: 8, 128>}, {transform_indices = @transform_1, window_bounds = array<i64: 8, 128>}, {transform_indices = @transform_2, window_bounds = array<i64: 1, 8, 128>}]} {
    %c0_i32 = arith.constant 0 : i32
    %0 = arith.cmpi eq, %arg1, %c0_i32 : i32
    %1 = arith.extui %0 : i1 to i32
    %c0_i32_0 = arith.constant 0 : i32
    %2 = arith.cmpi ne, %1, %c0_i32_0 : i32
    scf.if %2 {
      %cst = arith.constant 0.000000e+00 : f32
      %13 = vector.broadcast %cst : f32 to vector<1x8x128xf32>
      %c0 = arith.constant 0 : index
      %c0_4 = arith.constant 0 : index
      %c0_5 = arith.constant 0 : index
      %14 = vector.load %arg4[%c0, %c0_4, %c0_5] : memref<1x8x128xf32, #tpu.memory_space<vmem>>, vector<1x8x128xf32>
      tpu.vector_store %arg4[%c0, %c0_4, %c0_5], %13 {strides = array<i32>} : memref<1x8x128xf32, #tpu.memory_space<vmem>>, vector<1x8x128xf32>,
    } else {
    }
    %c1_i32 = arith.constant 1 : i32
    %3 = arith.muli %arg0, %c1_i32 : i32
    %4 = arith.addi %3, %arg1 : i32
    %c8_i32 = arith.constant 8 : i32
    %5 = arith.muli %4, %c8_i32 : i32
    %c8_i32_1 = arith.constant 8 : i32
    %6 = arith.addi %5, %c8_i32_1 : i32
    %c16_i32 = arith.constant 16 : i32
    %7 = arith.cmpi sle, %6, %c16_i32 : i32
    %8 = arith.extui %7 : i1 to i32
    %c0_i32_2 = arith.constant 0 : i32
    %9 = arith.cmpi ne, %8, %c0_i32_2 : i32
    scf.if %9 {
      %c0 = arith.constant 0 : index
      %c0_4 = arith.constant 0 : index
      %13 = vector.load %arg3[%c0, %c0_4] : memref<8x128xf32, #tpu.memory_space<vmem>>, vector<8x128xf32>
      %c0_5 = arith.constant 0 : index
      %c0_6 = arith.constant 0 : index
      %14 = vector.load %arg2[%c0_5, %c0_6] : memref<8x128xf32, #tpu.memory_space<vmem>>, vector<8x128xf32>
      %cst = arith.constant 1.000000e-03 : f32
      %15 = vector.broadcast %cst : f32 to vector<8x128xf32>
      %16 = arith.addf %13, %15 : vector<8x128xf32>
      %17 = tpu.reciprocal %16 {approx = true} : vector<8x128xf32> -> vector<8x128xf32>
      %18 = arith.mulf %16, %17 : vector<8x128xf32>
      %cst_7 = arith.constant 2.000000e+00 : f32
      %19 = vector.broadcast %cst_7 : f32 to vector<8x128xf32>
      %20 = arith.subf %19, %18 : vector<8x128xf32>
      %21 = arith.mulf %17, %20 : vector<8x128xf32>
      %22 = arith.subf %13, %14 : vector<8x128xf32>
      %23 = math.absf %22 : vector<8x128xf32>
      %24 = arith.mulf %23, %21 : vector<8x128xf32>
      %c0_8 = arith.constant 0 : index
      %c0_9 = arith.constant 0 : index
      %c0_10 = arith.constant 0 : index
      %25 = vector.load %arg4[%c0_8, %c0_9, %c0_10] : memref<1x8x128xf32, #tpu.memory_space<vmem>>, vector<1x8x128xf32>
      %26 = vector.shape_cast %25 : vector<1x8x128xf32> to vector<8x128xf32>
      %27 = vector.shape_cast %24 : vector<8x128xf32> to vector<1x8x128xf32>
      %cst_11 = arith.constant dense<0.000000e+00> : vector<8x128xf32>
      %28 = vector.multi_reduction <add>, %27, %cst_11 [0] : vector<1x8x128xf32> to vector<8x128xf32>
      %29 = arith.addf %26, %28 : vector<8x128xf32>
      %c0_12 = arith.constant 0 : index
      %c0_13 = arith.constant 0 : index
      %c0_14 = arith.constant 0 : index
      %30 = vector.load %arg4[%c0_12, %c0_13, %c0_14] : memref<1x8x128xf32, #tpu.memory_space<vmem>>, vector<1x8x128xf32>
      %31 = vector.shape_cast %30 : vector<1x8x128xf32> to vector<8x128xf32>
      %32 = vector.shape_cast %29 : vector<8x128xf32> to vector<1x8x128xf32>
      tpu.vector_store %arg4[%c0_12, %c0_13, %c0_14], %32 {strides = array<i32>} : memref<1x8x128xf32, #tpu.memory_space<vmem>>, vector<1x8x128xf32>,
    } else {
    }
    %true = arith.constant true
    %10 = arith.xori %7, %true : i1
    %11 = arith.extui %10 : i1 to i32
    %c0_i32_3 = arith.constant 0 : i32
    %12 = arith.cmpi ne, %11, %c0_i32_3 : i32
    scf.if %12 {
      %c0 = arith.constant 0 : index
      %c0_4 = arith.constant 0 : index
      %13 = vector.load %arg3[%c0, %c0_4] : memref<8x128xf32, #tpu.memory_space<vmem>>, vector<8x128xf32>
      %c0_5 = arith.constant 0 : index
      %c0_6 = arith.constant 0 : index
      %14 = vector.load %arg2[%c0_5, %c0_6] : memref<8x128xf32, #tpu.memory_space<vmem>>, vector<8x128xf32>
      %15 = tpu.iota {dimensions = array<i32: 0>} : vector<8x128xi32>
      %16 = vector.broadcast %5 : i32 to vector<8x128xi32>
      %17 = arith.addi %16, %15 : vector<8x128xi32>
      %c16_i32_7 = arith.constant 16 : i32
      %18 = vector.broadcast %c16_i32_7 : i32 to vector<8x128xi32>
      %19 = arith.cmpi slt, %17, %18 : vector<8x128xi32>
      %cst = arith.constant 1.000000e-03 : f32
      %20 = vector.broadcast %cst : f32 to vector<8x128xf32>
      %21 = arith.addf %13, %20 : vector<8x128xf32>
      %22 = tpu.reciprocal %21 {approx = true} : vector<8x128xf32> -> vector<8x128xf32>
      %23 = arith.mulf %21, %22 : vector<8x128xf32>
      %cst_8 = arith.constant 2.000000e+00 : f32
      %24 = vector.broadcast %cst_8 : f32 to vector<8x128xf32>
      %25 = arith.subf %24, %23 : vector<8x128xf32>
      %26 = arith.mulf %22, %25 : vector<8x128xf32>
      %27 = arith.subf %13, %14 : vector<8x128xf32>
      %28 = math.absf %27 : vector<8x128xf32>
      %29 = arith.mulf %28, %26 : vector<8x128xf32>
      %cst_9 = arith.constant 0.000000e+00 : f32
      %30 = vector.broadcast %cst_9 : f32 to vector<8x128xf32>
      %31 = arith.select %19, %29, %30 : vector<8x128xi1>, vector<8x128xf32>
      %c0_10 = arith.constant 0 : index
      %c0_11 = arith.constant 0 : index
      %c0_12 = arith.constant 0 : index
      %32 = vector.load %arg4[%c0_10, %c0_11, %c0_12] : memref<1x8x128xf32, #tpu.memory_space<vmem>>, vector<1x8x128xf32>
      %33 = vector.shape_cast %32 : vector<1x8x128xf32> to vector<8x128xf32>
      %34 = vector.shape_cast %31 : vector<8x128xf32> to vector<1x8x128xf32>
      %cst_13 = arith.constant dense<0.000000e+00> : vector<8x128xf32>
      %35 = vector.multi_reduction <add>, %34, %cst_13 [0] : vector<1x8x128xf32> to vector<8x128xf32>
      %36 = arith.addf %33, %35 : vector<8x128xf32>
      %c0_14 = arith.constant 0 : index
      %c0_15 = arith.constant 0 : index
      %c0_16 = arith.constant 0 : index
      %37 = vector.load %arg4[%c0_14, %c0_15, %c0_16] : memref<1x8x128xf32, #tpu.memory_space<vmem>>, vector<1x8x128xf32>
      %38 = vector.shape_cast %37 : vector<1x8x128xf32> to vector<8x128xf32>
      %39 = vector.shape_cast %36 : vector<8x128xf32> to vector<1x8x128xf32>
      tpu.vector_store %arg4[%c0_14, %c0_15, %c0_16], %39 {strides = array<i32>} : memref<1x8x128xf32, #tpu.memory_space<vmem>>, vector<1x8x128xf32>,
    } else {
    }
    return
  }
  func.func @transform_0(%arg0: i32, %arg1: i32) -> (i32, i32) {
    %c1_i32 = arith.constant 1 : i32
    %0 = arith.muli %arg0, %c1_i32 : i32
    %1 = arith.addi %0, %arg1 : i32
    %c1_i32_0 = arith.constant 1 : i32
    %2 = arith.minsi %1, %c1_i32_0 : i32
    %c0_i32 = arith.constant 0 : i32
    %c0_i32_1 = arith.constant 0 : i32
    return %2, %c0_i32 : i32, i32
  }
  func.func @transform_1(%arg0: i32, %arg1: i32) -> (i32, i32) {
    %c1_i32 = arith.constant 1 : i32
    %0 = arith.muli %arg0, %c1_i32 : i32
    %1 = arith.addi %0, %arg1 : i32
    %c1_i32_0 = arith.constant 1 : i32
    %2 = arith.minsi %1, %c1_i32_0 : i32
    %c0_i32 = arith.constant 0 : i32
    %c0_i32_1 = arith.constant 0 : i32
    return %2, %c0_i32 : i32, i32
  }
  func.func @transform_2(%arg0: i32, %arg1: i32) -> (i32, i32, i32) {
    %c0_i32 = arith.constant 0 : i32
    %c0_i32_0 = arith.constant 0 : i32
    %c0_i32_1 = arith.constant 0 : i32
    return %arg0, %c0_i32, %c0_i32_0 : i32, i32, i32
  }
}

</mosaic_0001>

<llo_original>
// kernel: tpu_custom_call.1
$region0: #{tpu_custom_call.1}
  #allocation0 [shape = 'u32[]', space=smem, size = 0x4, offset = 0x4, fixed_abs, tag = 'smem constant byte address 0x4 - core index']
  #allocation1 [shape = 'u32[144,128]{1,0:T(1,128)}', space=vmem, size = 0x12000, scoped, tag = 'internal scratch']
  %s0 = inlined_call_operand.hbm [shape: f32[16,128], index: 0, kind: input, shape index: {}]
  %s1 = inlined_call_operand.hbm [shape: f32[16,128], index: 1, kind: input, shape index: {}]
  %s2 = inlined_call_operand.hbm [shape: f32[2,8,128], index: 2, kind: output, shape index: {}]
  %s3 = sld [smem:[#allocation0]]
  $region61: #{tpu_custom_call.1} parent=0
    _
  %s5 = ssub.s32 1, %s3
  %s6 = scalar_select 0, %s5, %s3
  $region1: #{tpu_custom_call.1} parent=0
    #allocation2 [shape = 'u8[8192]{0}', space=vmem, size = 0x2000, scoped, tag = 'input window, operand 0']
    #allocation3 [shape = 's32[2]{0}', space=sflag, size = 0x8, scoped, tag = 'scoped memory for tpu_custom_call.1']
    #allocation4 [shape = 's32[2]{0}', space=sflag, size = 0x8, scoped, tag = 'scoped memory for tpu_custom_call.1']
    #allocation5 [shape = 'u8[8192]{0}', space=vmem, size = 0x2000, scoped, tag = 'input window, operand 1']
    #allocation6 [shape = 's32[2]{0}', space=sflag, size = 0x8, scoped, tag = 'scoped memory for tpu_custom_call.1']
    #allocation7 [shape = 'u8[8192]{0}', space=vmem, size = 0x2000, scoped, tag = 'output window, operand 0']
    %7 = vsyncpa [#allocation3], 0
    %s8 = scalar_lea.sflag [#allocation3], 1
    %9 = vsyncpa %s8, 0
    %10 = vsyncpa [#allocation6], 0
    %s11 = scalar_lea.sflag [#allocation6], 1
    %12 = vsyncpa %s11, 0
    %13 = vsyncpa [#allocation4], 0
    %s14 = scalar_lea.sflag [#allocation4], 1
    %15 = vsyncpa %s14, 0
    loop: start=0, step=1, limit=4
    $region2: #{tpu_custom_call.1} parent=1 // loop_pre_header
      _
    $region3: #{tpu_custom_call.1} parent=1 // loop_header
      %s17 = sphi 0, %s21
      %p18 = scmp.ge.s32.totalorder %s17, 4
      %s24 = sphi 0, %s36
      %s25 = sphi 0, %s32
      %s26 = sphi 0, %s24
      %s27 = sphi 0, %s25
      %s28 = sphi 0, %s26
      %s29 = sphi 0, %s27
      %s45 = sphi 0, %s47
      %s48 = sphi 0, %s45
      %s49 = sphi 0, %s48
      %s65 = sphi 0, %s49
      %s77 = sphi 0, %s79
      %s80 = sphi 0, %s77
      %s81 = sphi 0, %s80
      %s97 = sphi 0, %s81
      %s103 = sphi 0, %s105
      %s106 = sphi 0, %s103
      %s107 = sphi 0, %s106
      %s123 = sphi 0, %s107
    $region4: #{tpu_custom_call.1} parent=1 // loop_header_branch
      %20 = sbr.rel (%p18) target = $region8
    $region5: #{tpu_custom_call.1} parent=1 // loop_body
      %s22 = ssub.s32 %s17, 1
      %s23 = ssub.s32 %s17, 2
      %s30 = sadd.s32 1, %s25
      %p31 = scmp.ge.s32.totalorder %s30, 1
      %s32 = scalar_select %p31, 0, %s30
      %s33 = sadd.s32 1, %s24
      %s34 = scalar_select %p31, %s33, %s24
      %p35 = scmp.ge.s32.totalorder %s34, 2
      %s36 = scalar_select %p35, 0, %s34
      %s37 = sadd.s32 %s24, %s25
      %p38 = scmp.lt.s32.totalorder %s37, 1
      %s39 = scalar_select %p38, %s37, 1
      %s40 = sadd.s32 %s36, %s32
      %p41 = scmp.lt.s32.totalorder %s40, 1
      %s42 = scalar_select %p41, %s40, 1
      %s43 = ssub.s32 %s39, %s42
      %p44 = scmp.eq.s32.totalorder %s43, 0
      %s46 = sadd.s32 %s45, 1
      %s47 = scalar_select %p44, %s45, %s46
      %p50 = pneg %p44
      %p51 = scmp.eq.s32.totalorder %s17, 1
      %p52 = por %p50, %p51
      %p53 = scmp.ne.s32.totalorder %s45, %s48
      %p54 = scmp.eq.s32.totalorder %s17, 0
      %p55 = por %p53, %p54
      %p56 = scmp.ne.s32.totalorder %s45, %s48
      %p57 = scmp.eq.s32.totalorder %s22, 1
      %p58 = por %p56, %p57
      %p59 = scmp.ne.s32.totalorder %s48, %s49
      %p60 = scmp.eq.s32.totalorder %s22, 0
      %p61 = por %p59, %p60
      %p62 = scmp.ne.s32.totalorder %s48, %s49
      %p63 = scmp.eq.s32.totalorder %s23, 1
      %p64 = por %p62, %p63
      %p66 = scmp.ne.s32.totalorder %s49, %s65
      %p67 = scmp.eq.s32.totalorder %s23, 0
      %p68 = por %p66, %p67
      %s69 = sadd.s32 %s24, %s25
      %p70 = scmp.lt.s32.totalorder %s69, 1
      %s71 = scalar_select %p70, %s69, 1
      %s72 = sadd.s32 %s36, %s32
      %p73 = scmp.lt.s32.totalorder %s72, 1
      %s74 = scalar_select %p73, %s72, 1
      %s75 = ssub.s32 %s71, %s74
      %p76 = scmp.eq.s32.totalorder %s75, 0
      %s78 = sadd.s32 %s77, 1
      %s79 = scalar_select %p76, %s77, %s78
      %p82 = pneg %p76
      %p83 = scmp.eq.s32.totalorder %s17, 1
      %p84 = por %p82, %p83
      %p85 = scmp.ne.s32.totalorder %s77, %s80
      %p86 = scmp.eq.s32.totalorder %s17, 0
      %p87 = por %p85, %p86
      %p88 = scmp.ne.s32.totalorder %s77, %s80
      %p89 = scmp.eq.s32.totalorder %s22, 1
      %p90 = por %p88, %p89
      %p91 = scmp.ne.s32.totalorder %s80, %s81
      %p92 = scmp.eq.s32.totalorder %s22, 0
      %p93 = por %p91, %p92
      %p94 = scmp.ne.s32.totalorder %s80, %s81
      %p95 = scmp.eq.s32.totalorder %s23, 1
      %p96 = por %p94, %p95
      %p98 = scmp.ne.s32.totalorder %s81, %s97
      %p99 = scmp.eq.s32.totalorder %s23, 0
      %p100 = por %p98, %p99
      %s101 = ssub.s32 %s24, %s36
      %p102 = scmp.eq.s32.totalorder %s101, 0
      %s104 = sadd.s32 %s103, 1
      %s105 = scalar_select %p102, %s103, %s104
      %p108 = pneg %p102
      %p109 = scmp.eq.s32.totalorder %s17, 1
      %p110 = por %p108, %p109
      %p111 = scmp.ne.s32.totalorder %s103, %s106
      %p112 = scmp.eq.s32.totalorder %s17, 0
      %p113 = por %p111, %p112
      %p114 = scmp.ne.s32.totalorder %s103, %s106
      %p115 = scmp.eq.s32.totalorder %s22, 1
      %p116 = por %p114, %p115
      %p117 = scmp.ne.s32.totalorder %s106, %s107
      %p118 = scmp.eq.s32.totalorder %s22, 0
      %p119 = por %p117, %p118
      %p120 = scmp.ne.s32.totalorder %s106, %s107
      %p121 = scmp.eq.s32.totalorder %s23, 1
      %p122 = por %p120, %p121
      %p124 = scmp.ne.s32.totalorder %s107, %s123
      %p125 = scmp.eq.s32.totalorder %s23, 0
      %p126 = por %p124, %p125
      %p127 = scmp.le.s32.totalorder 1, %s17
      %p128 = scmp.lt.s32.totalorder %s17, 3
      %p129 = pnand %p127, %p128
      %p130 = pneg %p129
      // Predicated region
      $region9: #{tpu_custom_call.1} parent=5 // pred_check
        _
      $region10: #{tpu_custom_call.1} parent=5 // pred_check_branch
        %132 = sbr.rel (%p129) target = $region12
      $region11: #{tpu_custom_call.1} parent=5 // pred_region
        %s133 = ssub.s32 %s17, 1
      $region12: #{tpu_custom_call.1} parent=5 // pred_fallthru
        _
      %p134 = scmp.lt.s32.totalorder %s17, 2
      // Predicated region
      $region13: #{tpu_custom_call.1} parent=5 // pred_check
        %p135 = pneg %p134
      $region14: #{tpu_custom_call.1} parent=5 // pred_check_branch
        %137 = sbr.rel (%p135) target = $region16
      $region15: #{tpu_custom_call.1} parent=5 // pred_region
        // Predicated region
        $region17: #{tpu_custom_call.1} parent=15 // pred_check
          %p138 = pneg %p55
        $region18: #{tpu_custom_call.1} parent=15 // pred_check_branch
          %140 = sbr.rel (%p138) target = $region20
        $region19: #{tpu_custom_call.1} parent=15 // pred_region
          %s141 = sand.u32 %s45, 1
          %s142 = scalar_lea.sflag [#allocation3], %s141
          %s143 = sand.u32 %s45, 1
          %s144 = smul.addr %s143, 8
          %s145 = scalar_lea.vmem [#allocation2], %s144
          %s146 = sadd.s32 %s24, %s25
          %p147 = scmp.lt.s32.totalorder %s146, 1
          %s148 = scalar_select %p147, %s146, 1
          %s150 = ssub.s32 128, 128
          %151 = vsyncadd %s142, %s150
          %s152 = smul.addr %s148, 128
          %s153 = scalar_lea.hbm %s0, %s152
          %s155 = sshll.u32 %s145, 4
          %s156 = int_to_ptr.vmem [resolvable:$true] %s155
          %158 = dma.hbm_to_vmem [thread:$0]  %s153, 128, %s156, %s142
        $region20: #{tpu_custom_call.1} parent=15 // pred_fallthru
          _
        // Predicated region
        $region21: #{tpu_custom_call.1} parent=15 // pred_check
          %p159 = pneg %p87
        $region22: #{tpu_custom_call.1} parent=15 // pred_check_branch
          %161 = sbr.rel (%p159) target = $region24
        $region23: #{tpu_custom_call.1} parent=15 // pred_region
          %s162 = sand.u32 %s77, 1
          %s163 = scalar_lea.sflag [#allocation6], %s162
          %s164 = sand.u32 %s77, 1
          %s165 = smul.addr %s164, 8
          %s166 = scalar_lea.vmem [#allocation5], %s165
          %s167 = sadd.s32 %s24, %s25
          %p168 = scmp.lt.s32.totalorder %s167, 1
          %s169 = scalar_select %p168, %s167, 1
          %s171 = ssub.s32 128, 128
          %172 = vsyncadd %s163, %s171
          %s173 = smul.addr %s169, 128
          %s174 = scalar_lea.hbm %s1, %s173
          %s176 = sshll.u32 %s166, 4
          %s177 = int_to_ptr.vmem [resolvable:$true] %s176
          %179 = dma.hbm_to_vmem [thread:$0]  %s174, 128, %s177, %s163
        $region24: #{tpu_custom_call.1} parent=15 // pred_fallthru
          _
      $region16: #{tpu_custom_call.1} parent=5 // pred_fallthru
        _
      %p180 = scmp.le.s32.totalorder 1, %s17
      %p181 = scmp.lt.s32.totalorder %s17, 3
      %p182 = pnand %p180, %p181
      %p183 = pneg %p182
      // Predicated region
      $region25: #{tpu_custom_call.1} parent=5 // pred_check
        _
      $region26: #{tpu_custom_call.1} parent=5 // pred_check_branch
        %185 = sbr.rel (%p182) target = $region28
      $region27: #{tpu_custom_call.1} parent=5 // pred_region
        %s186 = ssub.s32 %s17, 1
        %s187 = sand.u32 %s48, 1
        %s188 = scalar_lea.sflag [#allocation3], %s187
        %s189 = sand.u32 %s48, 1
        %s190 = smul.addr %s189, 8
        %s191 = scalar_lea.vmem [#allocation2], %s190
        // Predicated region
        $region29: #{tpu_custom_call.1} parent=27 // pred_check
          %p192 = pneg %p61
        $region30: #{tpu_custom_call.1} parent=27 // pred_check_branch
          %194 = sbr.rel (%p192) target = $region32
        $region31: #{tpu_custom_call.1} parent=27 // pred_region
          %195 = dma.done %s188, 128
        $region32: #{tpu_custom_call.1} parent=27 // pred_fallthru
          _
        %s196 = sand.u32 %s80, 1
        %s197 = scalar_lea.sflag [#allocation6], %s196
        %s198 = sand.u32 %s80, 1
        %s199 = smul.addr %s198, 8
        %s200 = scalar_lea.vmem [#allocation5], %s199
        // Predicated region
        $region33: #{tpu_custom_call.1} parent=27 // pred_check
          %p201 = pneg %p93
        $region34: #{tpu_custom_call.1} parent=27 // pred_check_branch
          %203 = sbr.rel (%p201) target = $region36
        $region35: #{tpu_custom_call.1} parent=27 // pred_region
          %204 = dma.done %s197, 128
        $region36: #{tpu_custom_call.1} parent=27 // pred_fallthru
          _
        %s205 = sand.u32 %s48, 1
        %s206 = scalar_lea.sflag [#allocation3], %s205
        %s207 = sand.u32 %s48, 1
        %s208 = smul.addr %s207, 8
        %s209 = scalar_lea.vmem [#allocation2], %s208
        %p210 = pneg %p61
        %p211 = pneg %p58
        %s212 = sand.u32 %s80, 1
        %s213 = scalar_lea.sflag [#allocation6], %s212
        %s214 = sand.u32 %s80, 1
        %s215 = smul.addr %s214, 8
        %s216 = scalar_lea.vmem [#allocation5], %s215
        %p217 = pneg %p93
        %p218 = pneg %p90
        %p219 = pneg %p119
        %p220 = pneg %p116
        %s221 = sand.u32 %s106, 1
        %s222 = scalar_lea.sflag [#allocation4], %s221
        %s223 = sand.u32 %s106, 1
        %s224 = smul.addr %s223, 8
        %s225 = scalar_lea.vmem [#allocation7], %s224
        %s226 = sadd.s32 %s26, %s27
        %p227 = scmp.lt.s32.totalorder %s226, 1
        %s228 = scalar_select %p227, %s226, 1
        %s229 = sadd.s32 %s26, %s27
        %p230 = scmp.lt.s32.totalorder %s229, 1
        %s231 = scalar_select %p230, %s229, 1
        %p232 = scmp.eq.s32.totalorder %s27, 0
        // Predicated region
        $region37: #{tpu_custom_call.1} parent=27 // pred_check
          %p233 = pneg %p232
        $region38: #{tpu_custom_call.1} parent=27 // pred_check_branch
          %235 = sbr.rel (%p233) target = $region40
        $region39: #{tpu_custom_call.1} parent=27 // pred_region
          %236 = vst [vmem:[%s225] sm:$0xff] 0.0
        $region40: #{tpu_custom_call.1} parent=27 // pred_fallthru
          _
        %s237 = sadd.s32 %s26, %s27
        %s238 = smul.u32 %s237, 8
        %s239 = sadd.s32 %s238, 8
        %p240 = scmp.le.s32.totalorder %s239, 16
        // Predicated region
        $region41: #{tpu_custom_call.1} parent=27 // pred_check
          %p241 = pneg %p240
        $region42: #{tpu_custom_call.1} parent=27 // pred_check_branch
          %243 = sbr.rel (%p241) target = $region44
        $region43: #{tpu_custom_call.1} parent=27 // pred_region
          %v244 = vld [vmem:[%s200] sm:$0xff]
          %v245 = vld [vmem:[%s191] sm:$0xff]
          %v246 = vadd.f32 %v244, 0.001
          %v247 = vrcp.pop %v246
          %v248 = vmul.f32 %v246, %v247
          %v249 = vsub.f32 2.0, %v248
          %v250 = vmul.f32 %v247, %v249
          %v251 = vsub.f32 %v244, %v245
          %v252 = vand.u32 2147483647, %v251
          %v253 = vmul.f32 %v252, %v250
          %v254 = vld [vmem:[%s225] sm:$0xff]
          %v255 = vadd.f32 %v253, 0.0
          %v256 = vadd.f32 %v254, %v255
          %257 = vst [vmem:[%s225] sm:$0xff] %v256
        $region44: #{tpu_custom_call.1} parent=27 // pred_fallthru
          _
        %p258 = scmp.gt.s32.totalorder %s239, 16
        // Predicated region
        $region45: #{tpu_custom_call.1} parent=27 // pred_check
          %p259 = pneg %p258
        $region46: #{tpu_custom_call.1} parent=27 // pred_check_branch
          %261 = sbr.rel (%p259) target = $region48
        $region47: #{tpu_custom_call.1} parent=27 // pred_region
          %v262 = vld [vmem:[%s200] sm:$0xff]
          %v263 = vld [vmem:[%s191] sm:$0xff]
          %v264 = vlaneseq
          %v265 = vshrl.u32 %v264, 7
          %v266 = vstv %s238
          %v267 = vadd.s32 %v266, %v265
          %vm268 = vcmp.lt.s32.totalorder %v267, 16
          %v269 = vadd.f32 %v262, 0.001
          %v270 = vrcp.pop %v269
          %v271 = vmul.f32 %v269, %v270
          %v272 = vsub.f32 2.0, %v271
          %v273 = vmul.f32 %v270, %v272
          %v274 = vsub.f32 %v262, %v263
          %v275 = vand.u32 2147483647, %v274
          %v276 = vmul.f32 %v275, %v273
          %v277 = vsel %vm268, %v276, 0.0
          %v278 = vld [vmem:[%s225] sm:$0xff]
          %v279 = vadd.f32 %v277, 0.0
          %v280 = vadd.f32 %v278, %v279
          %281 = vst [vmem:[%s225] sm:$0xff] %v280
        $region48: #{tpu_custom_call.1} parent=27 // pred_fallthru
          _
        %s282 = sand.u32 %s106, 1
        %s283 = scalar_lea.sflag [#allocation4], %s282
        %s284 = sand.u32 %s106, 1
        %s285 = smul.addr %s284, 8
        %s286 = scalar_lea.vmem [#allocation7], %s285
        // Predicated region
        $region49: #{tpu_custom_call.1} parent=27 // pred_check
          %p287 = pneg %p116
        $region50: #{tpu_custom_call.1} parent=27 // pred_check_branch
          %289 = sbr.rel (%p287) target = $region52
        $region51: #{tpu_custom_call.1} parent=27 // pred_region
          %s291 = ssub.s32 128, 128
          %292 = vsyncadd %s283, %s291
          %s293 = smul.addr %s26, 128
          %s294 = scalar_lea.hbm %s2, %s293
          %s296 = sshll.u32 %s286, 4
          %s297 = int_to_ptr.vmem [resolvable:$true] %s296
          %299 = dma.vmem_to_hbm [thread:$0]  %s297, 128, %s294, %s283
        $region52: #{tpu_custom_call.1} parent=27 // pred_fallthru
          _
      $region28: #{tpu_custom_call.1} parent=5 // pred_fallthru
        _
      %p300 = scmp.le.s32.totalorder 2, %s17
      // Predicated region
      $region53: #{tpu_custom_call.1} parent=5 // pred_check
        %p301 = pneg %p300
      $region54: #{tpu_custom_call.1} parent=5 // pred_check_branch
        %303 = sbr.rel (%p301) target = $region56
      $region55: #{tpu_custom_call.1} parent=5 // pred_region
        %s304 = ssub.s32 %s17, 2
        // Predicated region
        $region57: #{tpu_custom_call.1} parent=55 // pred_check
          %p305 = pneg %p122
        $region58: #{tpu_custom_call.1} parent=55 // pred_check_branch
          %307 = sbr.rel (%p305) target = $region60
        $region59: #{tpu_custom_call.1} parent=55 // pred_region
          %s308 = sand.u32 %s107, 1
          %s309 = scalar_lea.sflag [#allocation4], %s308
          %s310 = sand.u32 %s107, 1
          %s311 = smul.addr %s310, 8
          %s312 = scalar_lea.vmem [#allocation7], %s311
          %313 = dma.done %s309, 128
        $region60: #{tpu_custom_call.1} parent=55 // pred_fallthru
          _
      $region56: #{tpu_custom_call.1} parent=5 // pred_fallthru
        _
    $region6: #{tpu_custom_call.1} parent=1 // loop_footer
      %s21 = sadd.s32 1, %s17
    $region7: #{tpu_custom_call.1} parent=1 // loop_footer_branch
      %16 = sbr.rel target = $region3
    $region8: #{tpu_custom_call.1} parent=1 // loop_exit
      _
    %314 = vsyncpa [#allocation3], 1
    %s315 = scalar_lea.sflag [#allocation3], 1
    %316 = vsyncpa %s315, 1
    %317 = vsyncpa [#allocation6], 1
    %s318 = scalar_lea.sflag [#allocation6], 1
    %319 = vsyncpa %s318, 1
    %320 = vsyncpa [#allocation4], 1
    %s321 = scalar_lea.sflag [#allocation4], 1
    %322 = vsyncpa %s321, 1

</llo_original>
